<compile_context>
chip_gen: v7x
topology: tpu7x:2x2x1
jax: 0.10.0
libtpu: 0.0.40
codegen_flags: <defaults>
</compile_context>

<pallas_src>
import jax
import jax.numpy as jnp
from jax.experimental import pallas as pl
from jax.experimental.pallas import tpu as pltpu


def _round_up(n, m):
    return ((n + m - 1) // m) * m


def _mlp_kernel(x_ref,
                w1_ref, b1_ref,
                w2_ref, b2_ref,
                w3_ref, b3_ref,
                w4_ref, b4_ref,
                o_ref):
    # x_ref: (8, TB) bf16 -- features in sublanes, batch in lanes (lane-dense).
    # Weights in torch (out, in) layout, bf16, hidden padded to Hp (sublane
    # granule).  Activations live as (Hp, TB) bf16; MXU accumulates in f32.
    xT = x_ref[...]

    # Layer 1: (Hp, 8) @ (8, TB) -> (Hp, TB); contraction axis already in
    # sublanes on both operands, no in-kernel relayout needed.
    h = jnp.dot(w1_ref[...], xT, preferred_element_type=jnp.float32)
    h = jnp.maximum(h.astype(jnp.bfloat16) + b1_ref[...], 0.0)

    # Layers 2, 3: (Hp, Hp) @ (Hp, TB); bias add + ReLU stay in bf16 on the VPU.
    h = jnp.dot(w2_ref[...], h, preferred_element_type=jnp.float32)
    h = jnp.maximum(h.astype(jnp.bfloat16) + b2_ref[...], 0.0)

    h = jnp.dot(w3_ref[...], h, preferred_element_type=jnp.float32)
    h = jnp.maximum(h.astype(jnp.bfloat16) + b3_ref[...], 0.0)

    # Layer 4 (H -> 1): bf16 VPU multiply + f32 sublane (XLU) reduction instead
    # of an N=1 matmul.  Result (1, TB) is stored lane-dense.
    y = jnp.sum((h * w4_ref[...]).astype(jnp.float32), axis=0, keepdims=True)
    o_ref[...] = (y + b4_ref[...]).astype(o_ref.dtype)


def regression_forward(x, params, *, block_batch=8192):
    """x: (B, 8) float32; params in torch layout (w: (out, in), b: (out,)).

    Returns (B, 1) float32.
    """
    B, F = x.shape
    assert F == 8, F
    H = params["w1"].shape[0]

    # Pad the hidden dim only to the sublane granule (16 for packed bf16) for
    # small H; keep 128-padding only for large H.
    Hp = _round_up(H, 16) if H < 128 else _round_up(H, 128)

    # Batch tile: as large as block_batch allows, but always >= 2 grid tiles
    # when B > 128 so the "parallel" axis can use both TCs on v7x.
    B_ceil = _round_up(B, 128)
    tb_cap = max(128, _round_up(block_batch, 128))
    if B_ceil >= 256:
        TB = min(tb_cap, _round_up((B_ceil + 1) // 2, 128))
    else:
        TB = B_ceil
    B_pad = _round_up(B, TB)
    n_tiles = B_pad // TB

    # ---- wrapper-side layout plumbing (in practice params are pre-padded) ----
    # x -> lane-dense (8, B_pad) bf16 slab (batch in the lane dimension).
    xT = jnp.pad(x, ((0, B_pad - B), (0, 0))).T.astype(jnp.bfloat16)

    def pad2(a, rows, cols):
        return jnp.pad(a, ((0, rows - a.shape[0]), (0, cols - a.shape[1])))

    w1 = pad2(params["w1"], Hp, 8).astype(jnp.bfloat16)                 # (Hp, 8)
    w2 = pad2(params["w2"], Hp, Hp).astype(jnp.bfloat16)                # (Hp, Hp)
    w3 = pad2(params["w3"], Hp, Hp).astype(jnp.bfloat16)                # (Hp, Hp)
    w4 = pad2(params["w4"].T, Hp, 1).astype(jnp.bfloat16)               # (Hp, 1)
    b1 = pad2(params["b1"].reshape(H, 1), Hp, 1).astype(jnp.bfloat16)   # (Hp, 1)
    b2 = pad2(params["b2"].reshape(H, 1), Hp, 1).astype(jnp.bfloat16)
    b3 = pad2(params["b3"].reshape(H, 1), Hp, 1).astype(jnp.bfloat16)
    b4 = params["b4"].reshape(1, 1).astype(jnp.float32)                 # (1, 1)

    def const(shape):
        return pl.BlockSpec(shape, lambda i: (0,) * len(shape))

    out = pl.pallas_call(
        _mlp_kernel,
        out_shape=jax.ShapeDtypeStruct((1, B_pad), jnp.float32),
        grid=(n_tiles,),
        in_specs=[
            pl.BlockSpec((8, TB), lambda i: (0, i)),      # pipelined batch tile
            const(w1.shape), const(b1.shape),             # weights: VMEM-resident
            const(w2.shape), const(b2.shape),
            const(w3.shape), const(b3.shape),
            const(w4.shape), const(b4.shape),
        ],
        out_specs=pl.BlockSpec((1, TB), lambda i: (0, i)),  # lane-dense output
        compiler_params=pltpu.CompilerParams(
            dimension_semantics=("parallel",),            # megacore on v7x
            vmem_limit_bytes=48 * 1024 * 1024,            # safe on v5e/v6e/v7x
        ),
    )(xT, w1, b1, w2, b2, w3, b3, w4, b4)

    return out[0, :B].reshape(B, 1)


def init_params(key, hidden_layer):
    """Torch-layout init mirroring nn.Linear's U(-1/sqrt(fan_in), 1/sqrt(fan_in))."""
    def linear(key, fan_in, fan_out):
        kw, kb = jax.random.split(key)
        bound = 1.0 / (fan_in ** 0.5)
        w = jax.random.uniform(kw, (fan_out, fan_in), jnp.float32, -bound, bound)
        b = jax.random.uniform(kb, (fan_out,), jnp.float32, -bound, bound)
        return w, b

    k1, k2, k3, k4 = jax.random.split(key, 4)
    w1, b1 = linear(k1, 8, hidden_layer)
    w2, b2 = linear(k2, hidden_layer, hidden_layer)
    w3, b3 = linear(k3, hidden_layer, hidden_layer)
    w4, b4 = linear(k4, hidden_layer, 1)
    return {"w1": w1, "b1": b1, "w2": w2, "b2": b2,
            "w3": w3, "b3": b3, "w4": w4, "b4": b4}


def regression_reference(x, p):
    """Pure-JAX reference mirroring the kernel's numerics
    (bf16 MXU inputs, f32 accumulation, bf16 bias/ReLU, f32 final reduction)."""
    bf = lambda a: a.astype(jnp.bfloat16)
    h = bf(x)
    for wk, bk in (("w1", "b1"), ("w2", "b2"), ("w3", "b3")):
        acc = jnp.dot(h, bf(p[wk]).T, preferred_element_type=jnp.float32)
        h = jnp.maximum(acc.astype(jnp.bfloat16) + bf(p[bk]), 0.0)
    prod = (h * bf(p["w4"])[0][None, :]).astype(jnp.float32)
    return jnp.sum(prod, axis=1, keepdims=True) + p["b4"].reshape(1, 1)


if __name__ == "__main__":
    key = jax.random.PRNGKey(0)
    k_x, k_p = jax.random.split(key)

    batch = 8
    hidden = 32

    x = jax.random.normal(k_x, (batch, 8), jnp.float32)
    params = init_params(k_p, hidden)

    out = jax.block_until_ready(regression_forward(x, params))
    ref = regression_reference(x, params)

    assert out.shape == (batch, 1), out.shape
    assert jnp.allclose(out, ref, atol=1e-2, rtol=1e-2), (
        "mismatch vs reference, max abs diff = "
        f"{float(jnp.max(jnp.abs(out - ref)))}")

    print("KERNEL_OK")
</pallas_src>

<mosaic_0001>
module attributes {stable_mosaic.version = 11 : i64} {
  func.func @_mlp_kernel(%arg0: i32, %arg1: memref<8x128xbf16, #tpu.memory_space<vmem>>, %arg2: memref<32x8xbf16, #tpu.memory_space<vmem>>, %arg3: memref<32x1xbf16, #tpu.memory_space<vmem>>, %arg4: memref<32x32xbf16, #tpu.memory_space<vmem>>, %arg5: memref<32x1xbf16, #tpu.memory_space<vmem>>, %arg6: memref<32x32xbf16, #tpu.memory_space<vmem>>, %arg7: memref<32x1xbf16, #tpu.memory_space<vmem>>, %arg8: memref<32x1xbf16, #tpu.memory_space<vmem>>, %arg9: memref<1x1xf32, #tpu.memory_space<vmem>>, %arg10: memref<1x128xf32, #tpu.memory_space<vmem>>) attributes {dimension_semantics = [#tpu.dimension_semantics<parallel>], iteration_bounds = array<i64: 1>, scalar_prefetch = 0 : i64, scratch_operands = 0 : i64, tpu.core_type = #tpu.core_type<tc>, window_params = [{transform_indices = @transform_0, window_bounds = array<i64: 8, 128>}, {pipeline_mode = #tpu.pipeline_mode<synchronous>, transform_indices = @transform_1, window_bounds = array<i64: 32, 8>}, {pipeline_mode = #tpu.pipeline_mode<synchronous>, transform_indices = @transform_2, window_bounds = array<i64: 32, 1>}, {pipeline_mode = #tpu.pipeline_mode<synchronous>, transform_indices = @transform_3, window_bounds = array<i64: 32, 32>}, {pipeline_mode = #tpu.pipeline_mode<synchronous>, transform_indices = @transform_4, window_bounds = array<i64: 32, 1>}, {pipeline_mode = #tpu.pipeline_mode<synchronous>, transform_indices = @transform_5, window_bounds = array<i64: 32, 32>}, {pipeline_mode = #tpu.pipeline_mode<synchronous>, transform_indices = @transform_6, window_bounds = array<i64: 32, 1>}, {pipeline_mode = #tpu.pipeline_mode<synchronous>, transform_indices = @transform_7, window_bounds = array<i64: 32, 1>}, {pipeline_mode = #tpu.pipeline_mode<synchronous>, transform_indices = @transform_8, window_bounds = array<i64: 1, 1>}, {transform_indices = @transform_9, window_bounds = array<i64: 1, 128>}]} {
    %c0 = arith.constant 0 : index
    %c0_0 = arith.constant 0 : index
    %0 = vector.load %arg1[%c0, %c0_0] : memref<8x128xbf16, #tpu.memory_space<vmem>>, vector<8x128xbf16>
    %c0_1 = arith.constant 0 : index
    %c0_2 = arith.constant 0 : index
    %1 = vector.load %arg2[%c0_1, %c0_2] : memref<32x8xbf16, #tpu.memory_space<vmem>>, vector<32x8xbf16>
    %cst = arith.constant dense<0.000000e+00> : vector<32x128xf32>
    %2 = tpu.matmul %1, %0, %cst {dimension_numbers = #tpu.dot_dimension_numbers<[1], [0], [0], [1], [0, 0, 1, 1], [], []>} : vector<32x8xbf16>, vector<8x128xbf16>, vector<32x128xf32> -> vector<32x128xf32>
    %3 = arith.truncf %2 : vector<32x128xf32> to vector<32x128xbf16>
    %c0_3 = arith.constant 0 : index
    %c0_4 = arith.constant 0 : index
    %4 = vector.load %arg3[%c0_3, %c0_4] : memref<32x1xbf16, #tpu.memory_space<vmem>>, vector<32x1xbf16>
    %5 = vector.broadcast %4 : vector<32x1xbf16> to vector<32x128xbf16>
    %6 = arith.addf %3, %5 : vector<32x128xbf16>
    %cst_5 = arith.constant 0.000000e+00 : bf16
    %7 = vector.broadcast %cst_5 : bf16 to vector<32x128xbf16>
    %8 = arith.maximumf %6, %7 : vector<32x128xbf16>
    %c0_6 = arith.constant 0 : index
    %c0_7 = arith.constant 0 : index
    %9 = vector.load %arg4[%c0_6, %c0_7] : memref<32x32xbf16, #tpu.memory_space<vmem>>, vector<32x32xbf16>
    %cst_8 = arith.constant dense<0.000000e+00> : vector<32x128xf32>
    %10 = tpu.matmul %9, %8, %cst_8 {dimension_numbers = #tpu.dot_dimension_numbers<[1], [0], [0], [1], [0, 0, 1, 1], [], []>} : vector<32x32xbf16>, vector<32x128xbf16>, vector<32x128xf32> -> vector<32x128xf32>
    %11 = arith.truncf %10 : vector<32x128xf32> to vector<32x128xbf16>
    %c0_9 = arith.constant 0 : index
    %c0_10 = arith.constant 0 : index
    %12 = vector.load %arg5[%c0_9, %c0_10] : memref<32x1xbf16, #tpu.memory_space<vmem>>, vector<32x1xbf16>
    %13 = vector.broadcast %12 : vector<32x1xbf16> to vector<32x128xbf16>
    %14 = arith.addf %11, %13 : vector<32x128xbf16>
    %cst_11 = arith.constant 0.000000e+00 : bf16
    %15 = vector.broadcast %cst_11 : bf16 to vector<32x128xbf16>
    %16 = arith.maximumf %14, %15 : vector<32x128xbf16>
    %c0_12 = arith.constant 0 : index
    %c0_13 = arith.constant 0 : index
    %17 = vector.load %arg6[%c0_12, %c0_13] : memref<32x32xbf16, #tpu.memory_space<vmem>>, vector<32x32xbf16>
    %cst_14 = arith.constant dense<0.000000e+00> : vector<32x128xf32>
    %18 = tpu.matmul %17, %16, %cst_14 {dimension_numbers = #tpu.dot_dimension_numbers<[1], [0], [0], [1], [0, 0, 1, 1], [], []>} : vector<32x32xbf16>, vector<32x128xbf16>, vector<32x128xf32> -> vector<32x128xf32>
    %19 = arith.truncf %18 : vector<32x128xf32> to vector<32x128xbf16>
    %c0_15 = arith.constant 0 : index
    %c0_16 = arith.constant 0 : index
    %20 = vector.load %arg7[%c0_15, %c0_16] : memref<32x1xbf16, #tpu.memory_space<vmem>>, vector<32x1xbf16>
    %21 = vector.broadcast %20 : vector<32x1xbf16> to vector<32x128xbf16>
    %22 = arith.addf %19, %21 : vector<32x128xbf16>
    %cst_17 = arith.constant 0.000000e+00 : bf16
    %23 = vector.broadcast %cst_17 : bf16 to vector<32x128xbf16>
    %24 = arith.maximumf %22, %23 : vector<32x128xbf16>
    %c0_18 = arith.constant 0 : index
    %c0_19 = arith.constant 0 : index
    %25 = vector.load %arg8[%c0_18, %c0_19] : memref<32x1xbf16, #tpu.memory_space<vmem>>, vector<32x1xbf16>
    %26 = vector.broadcast %25 : vector<32x1xbf16> to vector<32x128xbf16>
    %27 = arith.mulf %24, %26 : vector<32x128xbf16>
    %28 = arith.extf %27 : vector<32x128xbf16> to vector<32x128xf32>
    %cst_20 = arith.constant dense<0.000000e+00> : vector<128xf32>
    %29 = vector.multi_reduction <add>, %28, %cst_20 [0] : vector<32x128xf32> to vector<128xf32>
    %30 = vector.shape_cast %29 : vector<128xf32> to vector<1x128xf32>
    %c0_21 = arith.constant 0 : index
    %c0_22 = arith.constant 0 : index
    %31 = vector.load %arg9[%c0_21, %c0_22] : memref<1x1xf32, #tpu.memory_space<vmem>>, vector<1x1xf32>
    %32 = vector.broadcast %31 : vector<1x1xf32> to vector<1x128xf32>
    %33 = arith.addf %30, %32 : vector<1x128xf32>
    %c0_23 = arith.constant 0 : index
    %c0_24 = arith.constant 0 : index
    %34 = vector.load %arg10[%c0_23, %c0_24] : memref<1x128xf32, #tpu.memory_space<vmem>>, vector<1x128xf32>
    tpu.vector_store %arg10[%c0_23, %c0_24], %33 {strides = array<i32>} : memref<1x128xf32, #tpu.memory_space<vmem>>, vector<1x128xf32>,
    return
  }
  func.func @transform_0(%arg0: i32) -> (i32, i32) {
    %c0_i32 = arith.constant 0 : i32
    %c0_i32_0 = arith.constant 0 : i32
    return %c0_i32, %arg0 : i32, i32
  }
  func.func @transform_1(%arg0: i32) -> (i32, i32) {
    %c0_i32 = arith.constant 0 : i32
    %c0_i32_0 = arith.constant 0 : i32
    %c0_i32_1 = arith.constant 0 : i32
    return %c0_i32, %c0_i32_0 : i32, i32
  }
  func.func @transform_2(%arg0: i32) -> (i32, i32) {
    %c0_i32 = arith.constant 0 : i32
    %c0_i32_0 = arith.constant 0 : i32
    %c0_i32_1 = arith.constant 0 : i32
    return %c0_i32, %c0_i32_0 : i32, i32
  }
  func.func @transform_3(%arg0: i32) -> (i32, i32) {
    %c0_i32 = arith.constant 0 : i32
    %c0_i32_0 = arith.constant 0 : i32
    %c0_i32_1 = arith.constant 0 : i32
    return %c0_i32, %c0_i32_0 : i32, i32
  }
  func.func @transform_4(%arg0: i32) -> (i32, i32) {
    %c0_i32 = arith.constant 0 : i32
    %c0_i32_0 = arith.constant 0 : i32
    %c0_i32_1 = arith.constant 0 : i32
    return %c0_i32, %c0_i32_0 : i32, i32
  }
  func.func @transform_5(%arg0: i32) -> (i32, i32) {
    %c0_i32 = arith.constant 0 : i32
    %c0_i32_0 = arith.constant 0 : i32
    %c0_i32_1 = arith.constant 0 : i32
    return %c0_i32, %c0_i32_0 : i32, i32
  }
  func.func @transform_6(%arg0: i32) -> (i32, i32) {
    %c0_i32 = arith.constant 0 : i32
    %c0_i32_0 = arith.constant 0 : i32
    %c0_i32_1 = arith.constant 0 : i32
    return %c0_i32, %c0_i32_0 : i32, i32
  }
  func.func @transform_7(%arg0: i32) -> (i32, i32) {
    %c0_i32 = arith.constant 0 : i32
    %c0_i32_0 = arith.constant 0 : i32
    %c0_i32_1 = arith.constant 0 : i32
    return %c0_i32, %c0_i32_0 : i32, i32
  }
  func.func @transform_8(%arg0: i32) -> (i32, i32) {
    %c0_i32 = arith.constant 0 : i32
    %c0_i32_0 = arith.constant 0 : i32
    %c0_i32_1 = arith.constant 0 : i32
    return %c0_i32, %c0_i32_0 : i32, i32
  }
  func.func @transform_9(%arg0: i32) -> (i32, i32) {
    %c0_i32 = arith.constant 0 : i32
    %c0_i32_0 = arith.constant 0 : i32
    return %c0_i32, %arg0 : i32, i32
  }
}

</mosaic_0001>

<llo_original>
// kernel: tpu_custom_call.1
$region0: #{tpu_custom_call.1}
  #allocation0 [shape = 'u32[]', space=smem, size = 0x4, offset = 0x4, fixed_abs, tag = 'smem constant byte address 0x4 - core index']
  #allocation1 [shape = 'u32[144,128]{1,0:T(1,128)}', space=vmem, size = 0x12000, scoped, tag = 'internal scratch']
  #allocation2 [shape = 'f32[1,1]{1,0:T(1,128)S(1)}', space=vmem, size = 0x200, scoped, tag = 'scoped memory for tpu_custom_call.1']
  %s0 = inlined_call_operand.vmem [shape: bf16[8,128], index: 0, kind: input, shape index: {}]
  %s1 = inlined_call_operand.vmem [shape: bf16[32,8], index: 1, kind: input, shape index: {}]
  %s2 = inlined_call_operand.vmem [shape: bf16[32,1], index: 2, kind: input, shape index: {}]
  %s3 = inlined_call_operand.vmem [shape: bf16[32,32], index: 3, kind: input, shape index: {}]
  %s4 = inlined_call_operand.vmem [shape: bf16[32,1], index: 4, kind: input, shape index: {}]
  %s5 = inlined_call_operand.vmem [shape: bf16[32,32], index: 5, kind: input, shape index: {}]
  %s6 = inlined_call_operand.vmem [shape: bf16[32,1], index: 6, kind: input, shape index: {}]
  %s7 = inlined_call_operand.vmem [shape: bf16[32,1], index: 7, kind: input, shape index: {}]
  %s8 = inlined_call_operand.<no memory space> [shape: f32[1,1], index: 8, kind: input, shape index: {}]
  %s9 = inlined_call_operand.hbm [shape: f32[1,128], index: 9, kind: output, shape index: {}]
  %s10 = sld [smem:[#allocation0]]
  $region46: #{tpu_custom_call.1} parent=0
    _
  %s12 = ssub.s32 1, %s10
  %s13 = scalar_select 0, %s12, %s10
  %v14 = vstv %s8
  %15 = vst [vmem:[#allocation2] sm:$0x1] %v14
  $region1: #{tpu_custom_call.1} parent=0
    #allocation3 [shape = 'u8[512]{0}', space=vmem, size = 0x400, scoped, tag = 'output window, operand 0, single buffered']
    #allocation4 [shape = 's32[1]{0}', space=sflag, size = 0x4, scoped, tag = 'scoped memory for tpu_custom_call.1']
    %16 = vsyncpa [#allocation4], 0
    // Predicated region
    $region2: #{tpu_custom_call.1} parent=1 // pred_check
      _
    $region3: #{tpu_custom_call.1} parent=1 // pred_check_branch
      %18 = sbr.rel (0) target = $region5
    $region4: #{tpu_custom_call.1} parent=1 // pred_region
      _
    $region5: #{tpu_custom_call.1} parent=1 // pred_fallthru
      _
    // Predicated region
    $region6: #{tpu_custom_call.1} parent=1 // pred_check
      _
    $region7: #{tpu_custom_call.1} parent=1 // pred_check_branch
      %20 = sbr.rel (0) target = $region9
    $region8: #{tpu_custom_call.1} parent=1 // pred_region
      _
    $region9: #{tpu_custom_call.1} parent=1 // pred_fallthru
      _
    // Predicated region
    $region10: #{tpu_custom_call.1} parent=1 // pred_check
      _
    $region11: #{tpu_custom_call.1} parent=1 // pred_check_branch
      %22 = sbr.rel (0) target = $region13
    $region12: #{tpu_custom_call.1} parent=1 // pred_region
      _
    $region13: #{tpu_custom_call.1} parent=1 // pred_fallthru
      _
    // Predicated region
    $region14: #{tpu_custom_call.1} parent=1 // pred_check
      _
    $region15: #{tpu_custom_call.1} parent=1 // pred_check_branch
      %24 = sbr.rel (0) target = $region17
    $region16: #{tpu_custom_call.1} parent=1 // pred_region
      _
    $region17: #{tpu_custom_call.1} parent=1 // pred_fallthru
      _
    // Predicated region
    $region18: #{tpu_custom_call.1} parent=1 // pred_check
      _
    $region19: #{tpu_custom_call.1} parent=1 // pred_check_branch
      %26 = sbr.rel (0) target = $region21
    $region20: #{tpu_custom_call.1} parent=1 // pred_region
      _
    $region21: #{tpu_custom_call.1} parent=1 // pred_fallthru
      _
    // Predicated region
    $region22: #{tpu_custom_call.1} parent=1 // pred_check
      _
    $region23: #{tpu_custom_call.1} parent=1 // pred_check_branch
      %28 = sbr.rel (0) target = $region25
    $region24: #{tpu_custom_call.1} parent=1 // pred_region
      _
    $region25: #{tpu_custom_call.1} parent=1 // pred_fallthru
      _
    // Predicated region
    $region26: #{tpu_custom_call.1} parent=1 // pred_check
      _
    $region27: #{tpu_custom_call.1} parent=1 // pred_check_branch
      %30 = sbr.rel (0) target = $region29
    $region28: #{tpu_custom_call.1} parent=1 // pred_region
      _
    $region29: #{tpu_custom_call.1} parent=1 // pred_fallthru
      _
    // Predicated region
    $region30: #{tpu_custom_call.1} parent=1 // pred_check
      _
    $region31: #{tpu_custom_call.1} parent=1 // pred_check_branch
      %32 = sbr.rel (0) target = $region33
    $region32: #{tpu_custom_call.1} parent=1 // pred_region
      _
    $region33: #{tpu_custom_call.1} parent=1 // pred_fallthru
      _
    // Predicated region
    $region34: #{tpu_custom_call.1} parent=1 // pred_check
      _
    $region35: #{tpu_custom_call.1} parent=1 // pred_check_branch
      %34 = sbr.rel (0) target = $region37
    $region36: #{tpu_custom_call.1} parent=1 // pred_region
      _
    $region37: #{tpu_custom_call.1} parent=1 // pred_fallthru
      _
    %v36 = vld [vmem:[%s0] sm:$0xf]
    %v37 = vld [vmem:[%s1] sm:$0xf]
    %v38 = vld [vmem:[%s1 + $0x4] sm:$0xf]
    %v39 = vld [vmem:[%s1 + $0x8] sm:$0xf]
    %v40 = vld [vmem:[%s1 + $0xc] sm:$0xf]
    %v45 = vunpack.c.l.b16 %v37
    %v46 = vunpack.c.l.b16 %v38
    %v47 = vunpack.c.l.b16 %v39
    %v48 = vunpack.c.l.b16 %v40
    %v49 = vpack.c.b16 %v46, %v45
    %v50 = vpack.c.b16 %v48, %v47
    %vm51 = vcmask 64512
    %v53 = vsel %vm51, %v49, 0
    %v56 = vsel %vm51, %v50, 0
    %vm58 = vcmask 1043456
    %v60 = vsel %vm58, %v36, 0
    %62 = vmatprep.subr.bf16.mxu0 0
    %63 = vmatpush1.bf16.msra.mxu0 %v60
    %64 = vmatprep.subr.bf16.mxu0 0
    %65 = vmatpush1.bf16.msra.mxu0 0
    %66 = vmatprep.subr.bf16.mxu0 0
    %67 = vmatpush1.bf16.msra.mxu0 0
    %68 = vmatprep.subr.bf16.mxu0 0
    %69 = vmatpush1.bf16.msra.mxu0 0
    %70 = vmatprep.subr.bf16.mxu0 0
    %71 = vmatpush1.bf16.msra.mxu0 0
    %72 = vmatprep.subr.bf16.mxu0 0
    %73 = vmatpush1.bf16.msra.mxu0 0
    %74 = vmatprep.subr.bf16.mxu0 0
    %75 = vmatpush1.bf16.msra.mxu0 0
    %76 = vmatprep.subr.bf16.mxu0 0
    %77 = vmatpush1.bf16.msra.mxu0 0
    %78 = vmatprep.subr.bf16.mxu0 0
    %79 = vmatpush1.bf16.msra.mxu0 0
    %80 = vmatprep.subr.bf16.mxu0 0
    %81 = vmatpush1.bf16.msra.mxu0 0
    %82 = vmatprep.subr.bf16.mxu0 0
    %83 = vmatpush1.bf16.msra.mxu0 0
    %84 = vmatprep.subr.bf16.mxu0 0
    %85 = vmatpush1.bf16.msra.mxu0 0
    %86 = vmatprep.subr.bf16.mxu0 0
    %87 = vmatpush1.bf16.msra.mxu0 0
    %88 = vmatprep.subr.bf16.mxu0 0
    %89 = vmatpush1.bf16.msra.mxu0 0
    %90 = vmatprep.subr.bf16.mxu0 0
    %91 = vmatpush1.bf16.msra.mxu0 0
    %92 = vmatprep.subr.bf16.mxu0 0
    %93 = vmatpush1.bf16.msra.mxu0 0
    %94 = vmatprep.mubr.bf16.mxu0 0
    %95 = vmatmul.mubr.bf16.gmra.mrb[0].mxu0 %v53
    %v96 = vpop.f32.mrb[0].mxu0
    %v97 = vadd.f32 0.0, %v96
    %v98 = vpop.f32.mrb[0].mxu0
    %v99 = vpop.f32.mrb[0].mxu0
    %v100 = vadd.f32 0.0, %v99
    %v101 = vpop.f32.mrb[0].mxu0
    %102 = vmatprep.mubr.bf16.mxu0 0
    %103 = vmatmul.mubr.bf16.gmra.mrb[0].mxu0 %v56
    %v104 = vpop.f32.mrb[0].mxu0
    %v105 = vadd.f32 0.0, %v104
    %v106 = vpop.f32.mrb[0].mxu0
    %v107 = vpop.f32.mrb[0].mxu0
    %v108 = vadd.f32 0.0, %v107
    %v109 = vpop.f32.mrb[0].mxu0
    %110 = vdwg.mxu0
    %v111 = vpack.c.bf16 %v100, %v97
    %v112 = vpack.c.bf16 %v108, %v105
    %v113 = vld [vmem:[%s2] sm:$0xf]
    %v114 = vld [vmem:[%s2 + $0x4] sm:$0xf]
    %v115 = vld [vmem:[%s2 + $0x8] sm:$0xf]
    %v116 = vld [vmem:[%s2 + $0xc] sm:$0xf]
    %118 = vset.pattern.permute.xlu0 0
    %119 = vperm.xlu0 %118, %v113
    %v120 = vpop.permute.xlu0 %119
    %v123 = vunpack.c.l.s4 839922192
    %v124 = vunpack.c.0.s8 %v123
    %v125 = vlaneseq
    %v126 = vshrl.u32 %v125, 7
    %v127 = vsub.s32 %v124, %v126
    %v128 = vrot.slane %v120, %v127
    %130 = vset.pattern.permute.xlu0 0
    %131 = vperm.xlu0 %130, %v114
    %v132 = vpop.permute.xlu0 %131
    %v135 = vunpack.c.l.s4 839922192
    %v136 = vunpack.c.0.s8 %v135
    %v137 = vlaneseq
    %v138 = vshrl.u32 %v137, 7
    %v139 = vsub.s32 %v136, %v138
    %v140 = vrot.slane %v132, %v139
    %142 = vset.pattern.permute.xlu0 0
    %143 = vperm.xlu0 %142, %v115
    %v144 = vpop.permute.xlu0 %143
    %v147 = vunpack.c.l.s4 839922192
    %v148 = vunpack.c.0.s8 %v147
    %v149 = vlaneseq
    %v150 = vshrl.u32 %v149, 7
    %v151 = vsub.s32 %v148, %v150
    %v152 = vrot.slane %v144, %v151
    %154 = vset.pattern.permute.xlu0 0
    %155 = vperm.xlu0 %154, %v116
    %v156 = vpop.permute.xlu0 %155
    %v159 = vunpack.c.l.s4 839922192
    %v160 = vunpack.c.0.s8 %v159
    %v161 = vlaneseq
    %v162 = vshrl.u32 %v161, 7
    %v163 = vsub.s32 %v160, %v162
    %v164 = vrot.slane %v156, %v163
    %v169 = vunpack.c.l.b16 %v128
    %v170 = vunpack.c.l.b16 %v140
    %v171 = vunpack.c.l.b16 %v152
    %v172 = vunpack.c.l.b16 %v164
    %v173 = vpack.c.b16 %v170, %v169
    %v174 = vpack.c.b16 %v172, %v171
    %v177 = vadd.bf16 %v111, %v173
    %v178 = vadd.bf16 %v112, %v174
    %v179 = vmax.bf16 %v177, 0
    %v180 = vmax.bf16 %v178, 0
    %v181 = vld [vmem:[%s3] sm:$0xf]
    %v182 = vld [vmem:[%s3 + $0x4] sm:$0xf]
    %v183 = vld [vmem:[%s3 + $0x8] sm:$0xf]
    %v184 = vld [vmem:[%s3 + $0xc] sm:$0xf]
    %v189 = vunpack.c.l.b16 %v181
    %v190 = vunpack.c.l.b16 %v182
    %v191 = vunpack.c.l.b16 %v183
    %v192 = vunpack.c.l.b16 %v184
    %v193 = vpack.c.b16 %v190, %v189
    %v194 = vpack.c.b16 %v192, %v191
    %vm195 = vcmask 261120
    %v197 = vsel %vm195, %v193, 0
    %v200 = vsel %vm195, %v194, 0
    %202 = vmatprep.subr.bf16.mxu0 0
    %203 = vmatpush1.bf16.msra.mxu0 %v179
    %204 = vmatprep.subr.bf16.mxu0 0
    %205 = vmatpush1.bf16.msra.mxu0 %v180
    %206 = vmatprep.subr.bf16.mxu0 0
    %207 = vmatpush1.bf16.msra.mxu0 0
    %208 = vmatprep.subr.bf16.mxu0 0
    %209 = vmatpush1.bf16.msra.mxu0 0
    %210 = vmatprep.subr.bf16.mxu0 0
    %211 = vmatpush1.bf16.msra.mxu0 0
    %212 = vmatprep.subr.bf16.mxu0 0
    %213 = vmatpush1.bf16.msra.mxu0 0
    %214 = vmatprep.subr.bf16.mxu0 0
    %215 = vmatpush1.bf16.msra.mxu0 0
    %216 = vmatprep.subr.bf16.mxu0 0
    %217 = vmatpush1.bf16.msra.mxu0 0
    %218 = vmatprep.subr.bf16.mxu0 0
    %219 = vmatpush1.bf16.msra.mxu0 0
    %220 = vmatprep.subr.bf16.mxu0 0
    %221 = vmatpush1.bf16.msra.mxu0 0
    %222 = vmatprep.subr.bf16.mxu0 0
    %223 = vmatpush1.bf16.msra.mxu0 0
    %224 = vmatprep.subr.bf16.mxu0 0
    %225 = vmatpush1.bf16.msra.mxu0 0
    %226 = vmatprep.subr.bf16.mxu0 0
    %227 = vmatpush1.bf16.msra.mxu0 0
    %228 = vmatprep.subr.bf16.mxu0 0
    %229 = vmatpush1.bf16.msra.mxu0 0
    %230 = vmatprep.subr.bf16.mxu0 0
    %231 = vmatpush1.bf16.msra.mxu0 0
    %232 = vmatprep.subr.bf16.mxu0 0
    %233 = vmatpush1.bf16.msra.mxu0 0
    %234 = vmatprep.mubr.bf16.mxu0 0
    %235 = vmatmul.mubr.bf16.gmra.mrb[0].mxu0 %v197
    %v236 = vpop.f32.mrb[0].mxu0
    %v237 = vadd.f32 0.0, %v236
    %v238 = vpop.f32.mrb[0].mxu0
    %v239 = vpop.f32.mrb[0].mxu0
    %v240 = vadd.f32 0.0, %v239
    %v241 = vpop.f32.mrb[0].mxu0
    %242 = vmatprep.mubr.bf16.mxu0 0
    %243 = vmatmul.mubr.bf16.gmra.mrb[0].mxu0 %v200
    %v244 = vpop.f32.mrb[0].mxu0
    %v245 = vadd.f32 0.0, %v244
    %v246 = vpop.f32.mrb[0].mxu0
    %v247 = vpop.f32.mrb[0].mxu0
    %v248 = vadd.f32 0.0, %v247
    %v249 = vpop.f32.mrb[0].mxu0
    %250 = vdwg.mxu0
    %v251 = vpack.c.bf16 %v240, %v237
    %v252 = vpack.c.bf16 %v248, %v245
    %v253 = vld [vmem:[%s4] sm:$0xf]
    %v254 = vld [vmem:[%s4 + $0x4] sm:$0xf]
    %v255 = vld [vmem:[%s4 + $0x8] sm:$0xf]
    %v256 = vld [vmem:[%s4 + $0xc] sm:$0xf]
    %258 = vset.pattern.permute.xlu0 0
    %259 = vperm.xlu0 %258, %v253
    %v260 = vpop.permute.xlu0 %259
    %v263 = vunpack.c.l.s4 839922192
    %v264 = vunpack.c.0.s8 %v263
    %v265 = vlaneseq
    %v266 = vshrl.u32 %v265, 7
    %v267 = vsub.s32 %v264, %v266
    %v268 = vrot.slane %v260, %v267
    %270 = vset.pattern.permute.xlu0 0
    %271 = vperm.xlu0 %270, %v254
    %v272 = vpop.permute.xlu0 %271
    %v275 = vunpack.c.l.s4 839922192
    %v276 = vunpack.c.0.s8 %v275
    %v277 = vlaneseq
    %v278 = vshrl.u32 %v277, 7
    %v279 = vsub.s32 %v276, %v278
    %v280 = vrot.slane %v272, %v279
    %282 = vset.pattern.permute.xlu0 0
    %283 = vperm.xlu0 %282, %v255
    %v284 = vpop.permute.xlu0 %283
    %v287 = vunpack.c.l.s4 839922192
    %v288 = vunpack.c.0.s8 %v287
    %v289 = vlaneseq
    %v290 = vshrl.u32 %v289, 7
    %v291 = vsub.s32 %v288, %v290
    %v292 = vrot.slane %v284, %v291
    %294 = vset.pattern.permute.xlu0 0
    %295 = vperm.xlu0 %294, %v256
    %v296 = vpop.permute.xlu0 %295
    %v299 = vunpack.c.l.s4 839922192
    %v300 = vunpack.c.0.s8 %v299
    %v301 = vlaneseq
    %v302 = vshrl.u32 %v301, 7
    %v303 = vsub.s32 %v300, %v302
    %v304 = vrot.slane %v296, %v303
    %v309 = vunpack.c.l.b16 %v268
    %v310 = vunpack.c.l.b16 %v280
    %v311 = vunpack.c.l.b16 %v292
    %v312 = vunpack.c.l.b16 %v304
    %v313 = vpack.c.b16 %v310, %v309
    %v314 = vpack.c.b16 %v312, %v311
    %v317 = vadd.bf16 %v251, %v313
    %v318 = vadd.bf16 %v252, %v314
    %v319 = vmax.bf16 %v317, 0
    %v320 = vmax.bf16 %v318, 0
    %v321 = vld [vmem:[%s5] sm:$0xf]
    %v322 = vld [vmem:[%s5 + $0x4] sm:$0xf]
    %v323 = vld [vmem:[%s5 + $0x8] sm:$0xf]
    %v324 = vld [vmem:[%s5 + $0xc] sm:$0xf]
    %v329 = vunpack.c.l.b16 %v321
    %v330 = vunpack.c.l.b16 %v322
    %v331 = vunpack.c.l.b16 %v323
    %v332 = vunpack.c.l.b16 %v324
    %v333 = vpack.c.b16 %v330, %v329
    %v334 = vpack.c.b16 %v332, %v331
    %v336 = vsel %vm195, %v333, 0
    %v339 = vsel %vm195, %v334, 0
    %341 = vmatprep.subr.bf16.mxu0 0
    %342 = vmatpush1.bf16.msra.mxu0 %v319
    %343 = vmatprep.subr.bf16.mxu0 0
    %344 = vmatpush1.bf16.msra.mxu0 %v320
    %345 = vmatprep.subr.bf16.mxu0 0
    %346 = vmatpush1.bf16.msra.mxu0 0
    %347 = vmatprep.subr.bf16.mxu0 0
    %348 = vmatpush1.bf16.msra.mxu0 0
    %349 = vmatprep.subr.bf16.mxu0 0
    %350 = vmatpush1.bf16.msra.mxu0 0
    %351 = vmatprep.subr.bf16.mxu0 0
    %352 = vmatpush1.bf16.msra.mxu0 0
    %353 = vmatprep.subr.bf16.mxu0 0
    %354 = vmatpush1.bf16.msra.mxu0 0
    %355 = vmatprep.subr.bf16.mxu0 0
    %356 = vmatpush1.bf16.msra.mxu0 0
    %357 = vmatprep.subr.bf16.mxu0 0
    %358 = vmatpush1.bf16.msra.mxu0 0
    %359 = vmatprep.subr.bf16.mxu0 0
    %360 = vmatpush1.bf16.msra.mxu0 0
    %361 = vmatprep.subr.bf16.mxu0 0
    %362 = vmatpush1.bf16.msra.mxu0 0
    %363 = vmatprep.subr.bf16.mxu0 0
    %364 = vmatpush1.bf16.msra.mxu0 0
    %365 = vmatprep.subr.bf16.mxu0 0
    %366 = vmatpush1.bf16.msra.mxu0 0
    %367 = vmatprep.subr.bf16.mxu0 0
    %368 = vmatpush1.bf16.msra.mxu0 0
    %369 = vmatprep.subr.bf16.mxu0 0
    %370 = vmatpush1.bf16.msra.mxu0 0
    %371 = vmatprep.subr.bf16.mxu0 0
    %372 = vmatpush1.bf16.msra.mxu0 0
    %373 = vmatprep.mubr.bf16.mxu0 0
    %374 = vmatmul.mubr.bf16.gmra.mrb[0].mxu0 %v336
    %v375 = vpop.f32.mrb[0].mxu0
    %v376 = vadd.f32 0.0, %v375
    %v377 = vpop.f32.mrb[0].mxu0
    %v378 = vpop.f32.mrb[0].mxu0
    %v379 = vadd.f32 0.0, %v378
    %v380 = vpop.f32.mrb[0].mxu0
    %381 = vmatprep.mubr.bf16.mxu0 0
    %382 = vmatmul.mubr.bf16.gmra.mrb[0].mxu0 %v339
    %v383 = vpop.f32.mrb[0].mxu0
    %v384 = vadd.f32 0.0, %v383
    %v385 = vpop.f32.mrb[0].mxu0
    %v386 = vpop.f32.mrb[0].mxu0
    %v387 = vadd.f32 0.0, %v386
    %v388 = vpop.f32.mrb[0].mxu0
    %389 = vdwg.mxu0
    %v390 = vpack.c.bf16 %v379, %v376
    %v391 = vpack.c.bf16 %v387, %v384
    %v392 = vld [vmem:[%s6] sm:$0xf]
    %v393 = vld [vmem:[%s6 + $0x4] sm:$0xf]
    %v394 = vld [vmem:[%s6 + $0x8] sm:$0xf]
    %v395 = vld [vmem:[%s6 + $0xc] sm:$0xf]
    %397 = vset.pattern.permute.xlu0 0
    %398 = vperm.xlu0 %397, %v392
    %v399 = vpop.permute.xlu0 %398
    %v402 = vunpack.c.l.s4 839922192
    %v403 = vunpack.c.0.s8 %v402
    %v404 = vlaneseq
    %v405 = vshrl.u32 %v404, 7
    %v406 = vsub.s32 %v403, %v405
    %v407 = vrot.slane %v399, %v406
    %409 = vset.pattern.permute.xlu0 0
    %410 = vperm.xlu0 %409, %v393
    %v411 = vpop.permute.xlu0 %410
    %v414 = vunpack.c.l.s4 839922192
    %v415 = vunpack.c.0.s8 %v414
    %v416 = vlaneseq
    %v417 = vshrl.u32 %v416, 7
    %v418 = vsub.s32 %v415, %v417
    %v419 = vrot.slane %v411, %v418
    %421 = vset.pattern.permute.xlu0 0
    %422 = vperm.xlu0 %421, %v394
    %v423 = vpop.permute.xlu0 %422
    %v426 = vunpack.c.l.s4 839922192
    %v427 = vunpack.c.0.s8 %v426
    %v428 = vlaneseq
    %v429 = vshrl.u32 %v428, 7
    %v430 = vsub.s32 %v427, %v429
    %v431 = vrot.slane %v423, %v430
    %433 = vset.pattern.permute.xlu0 0
    %434 = vperm.xlu0 %433, %v395
    %v435 = vpop.permute.xlu0 %434
    %v438 = vunpack.c.l.s4 839922192
    %v439 = vunpack.c.0.s8 %v438
    %v440 = vlaneseq
    %v441 = vshrl.u32 %v440, 7
    %v442 = vsub.s32 %v439, %v441
    %v443 = vrot.slane %v435, %v442
    %v448 = vunpack.c.l.b16 %v407
    %v449 = vunpack.c.l.b16 %v419
    %v450 = vunpack.c.l.b16 %v431
    %v451 = vunpack.c.l.b16 %v443
    %v452 = vpack.c.b16 %v449, %v448
    %v453 = vpack.c.b16 %v451, %v450
    %v456 = vadd.bf16 %v390, %v452
    %v457 = vadd.bf16 %v391, %v453
    %v458 = vmax.bf16 %v456, 0
    %v459 = vmax.bf16 %v457, 0
    %v460 = vld [vmem:[%s7] sm:$0xf]
    %v461 = vld [vmem:[%s7 + $0x4] sm:$0xf]
    %v462 = vld [vmem:[%s7 + $0x8] sm:$0xf]
    %v463 = vld [vmem:[%s7 + $0xc] sm:$0xf]
    %465 = vset.pattern.permute.xlu0 0
    %466 = vperm.xlu0 %465, %v460
    %v467 = vpop.permute.xlu0 %466
    %v470 = vunpack.c.l.s4 839922192
    %v471 = vunpack.c.0.s8 %v470
    %v472 = vlaneseq
    %v473 = vshrl.u32 %v472, 7
    %v474 = vsub.s32 %v471, %v473
    %v475 = vrot.slane %v467, %v474
    %477 = vset.pattern.permute.xlu0 0
    %478 = vperm.xlu0 %477, %v461
    %v479 = vpop.permute.xlu0 %478
    %v482 = vunpack.c.l.s4 839922192
    %v483 = vunpack.c.0.s8 %v482
    %v484 = vlaneseq
    %v485 = vshrl.u32 %v484, 7
    %v486 = vsub.s32 %v483, %v485
    %v487 = vrot.slane %v479, %v486
    %489 = vset.pattern.permute.xlu0 0
    %490 = vperm.xlu0 %489, %v462
    %v491 = vpop.permute.xlu0 %490
    %v494 = vunpack.c.l.s4 839922192
    %v495 = vunpack.c.0.s8 %v494
    %v496 = vlaneseq
    %v497 = vshrl.u32 %v496, 7
    %v498 = vsub.s32 %v495, %v497
    %v499 = vrot.slane %v491, %v498
    %501 = vset.pattern.permute.xlu0 0
    %502 = vperm.xlu0 %501, %v463
    %v503 = vpop.permute.xlu0 %502
    %v506 = vunpack.c.l.s4 839922192
    %v507 = vunpack.c.0.s8 %v506
    %v508 = vlaneseq
    %v509 = vshrl.u32 %v508, 7
    %v510 = vsub.s32 %v507, %v509
    %v511 = vrot.slane %v503, %v510
    %v516 = vunpack.c.l.b16 %v475
    %v517 = vunpack.c.l.b16 %v487
    %v518 = vunpack.c.l.b16 %v499
    %v519 = vunpack.c.l.b16 %v511
    %v520 = vpack.c.b16 %v517, %v516
    %v521 = vpack.c.b16 %v519, %v518
    %v524 = vmul.bf16 %v458, %v520
    %v525 = vmul.bf16 %v459, %v521
    %v526 = vunpack.c.l.bf16 %v524
    %v527 = vunpack.c.h.bf16 %v524
    %v528 = vunpack.c.l.bf16 %v525
    %v529 = vunpack.c.h.bf16 %v525
    %v530 = vadd.f32 %v526, %v527
    %v531 = vadd.f32 %v530, %v528
    %v532 = vadd.f32 %v531, %v529
    %v533 = vrot.slane %v532, 4
    %v534 = vadd.f32 %v532, %v533
    %v535 = vrot.slane %v534, 2
    %v536 = vadd.f32 %v534, %v535
    %v537 = vrot.slane %v536, 1
    %v538 = vadd.f32 %v536, %v537
    %v539 = vld [vmem:[#allocation2] sm:$0x1]
    %541 = vset.pattern.permute.xlu0 0
    %542 = vperm.xlu0 %541, %v539
    %v543 = vpop.permute.xlu0 %542
    %v545 = vlaneseq
    %v546 = vshrl.u32 %v545, 7
    %v547 = vsub.s32 0, %v546
    %v548 = vrot.slane %v543, %v547
    %v549 = vadd.f32 %v538, %v548
    %550 = vst [vmem:[#allocation3] sm:$0x1] %v549
    // Predicated region
    $region38: #{tpu_custom_call.1} parent=1 // pred_check
      _
    $region39: #{tpu_custom_call.1} parent=1 // pred_check_branch
      %552 = sbr.rel (0) target = $region41
    $region40: #{tpu_custom_call.1} parent=1 // pred_region
      %s554 = ssub.s32 16, 16
      %555 = vsyncadd [#allocation4], %s554
      %s557 = sshll.u32 [#allocation3], 4
      %s558 = int_to_ptr.vmem [resolvable:$true] %s557
      %560 = dma.vmem_to_hbm [thread:$0]  %s558, 16, %s9, [#allocation4]
    $region41: #{tpu_custom_call.1} parent=1 // pred_fallthru
      _
    // Predicated region
    $region42: #{tpu_custom_call.1} parent=1 // pred_check
      _
    $region43: #{tpu_custom_call.1} parent=1 // pred_check_branch
      %562 = sbr.rel (0) target = $region45
    $region44: #{tpu_custom_call.1} parent=1 // pred_region
      %563 = dma.done [#allocation4], 16
    $region45: #{tpu_custom_call.1} parent=1 // pred_fallthru
      _
    %564 = vsyncpa [#allocation4], 1

</llo_original>
